<compile_context>
chip_gen: v7x
topology: tpu7x:2x2x1
jax: 0.10.0
libtpu: 0.0.40
codegen_flags: <defaults>
</compile_context>

<pallas_src>
import functools

import jax
import jax.numpy as jnp
from jax.experimental import pallas as pl
from jax.experimental.pallas import tpu as pltpu


def _round_up(a, m):
    return -(-a // m) * m


# ---------------------------------------------------------------------------
# Parameter packing: one small f32 matrix, DMA'd once, resident across steps.
# Row layout (C % 8 == 0, so every row offset is sublane-aligned):
#   [0, C)          cols [0, c8) : w1^T * (1/HW)   (pool becomes a plain sum)
#   [C, C + c8)     cols [0, C)  : w2^T
#   [C + c8p]       cols [0, c8) : b1              (c8p = round_up(c8, 8))
#   [C + c8p + 8]   cols [0, C)  : b2
# ---------------------------------------------------------------------------
def _pack_params(w1, b1, w2, b2, hw):
    c8, C = w1.shape
    c8p = _round_up(c8, 8)
    R = C + c8p + 9
    p = jnp.zeros((R, C), jnp.float32)
    p = p.at[0:C, 0:c8].set(w1.T.astype(jnp.float32) / float(hw))
    p = p.at[C:C + c8, 0:C].set(w2.T.astype(jnp.float32))
    p = p.at[C + c8p, 0:c8].set(b1.astype(jnp.float32))
    p = p.at[C + c8p + 8, 0:C].set(b2.astype(jnp.float32))
    return p


def _se_mlp(s, p_ref):
    """Squeeze-excite MLP on pooled sums s: (B, C) -> (B, C) gates.
    1/HW is already folded into w1^T inside p_ref."""
    C = s.shape[-1]
    c8 = C // 8
    c8p = _round_up(c8, 8)
    w1t = p_ref[0:C, 0:c8]
    w2t = p_ref[C:C + c8, 0:C]
    b1 = p_ref[C + c8p:C + c8p + 1, 0:c8]
    b2 = p_ref[C + c8p + 8:C + c8p + 9, 0:C]
    h = jnp.maximum(jnp.dot(s, w1t, preferred_element_type=jnp.float32) + b1, 0.0)
    return jax.nn.sigmoid(jnp.dot(h, w2t, preferred_element_type=jnp.float32) + b2)


# ---------------------------------------------------------------------------
# Fused single-pass kernel: whole image(s) resident per grid step.
# ---------------------------------------------------------------------------
def _ca_fused_kernel(x_ref, p_ref, o_ref):
    # Pool straight from the ref so only the tiny (B, C) intermediates stay
    # live across the MLP (no multi-MiB value spanning the matmuls).
    s = jnp.sum(x_ref[...], axis=-1)              # (b_tile, C)
    y = _se_mlp(s, p_ref)                         # (b_tile, C)
    # Re-read the already VMEM-resident input block for the rescale.
    o_ref[...] = x_ref[...] * y[:, :, None]


# ---------------------------------------------------------------------------
# Two-pass HW-tiled fallback (single image larger than the VMEM block budget).
# ---------------------------------------------------------------------------
def _ca_pool_kernel(x_ref, p_ref, y_ref, acc_ref, *, hw_total):
    j = pl.program_id(1)

    @pl.when(j == 0)
    def _():
        acc_ref[...] = jnp.zeros_like(acc_ref)

    hw_tile = x_ref.shape[-1]
    # Mask the ragged tail HW block: out-of-bounds lanes hold garbage and must
    # not enter the reduction.  Dense blocks pay two cheap VPU ops under DMA.
    lane = jax.lax.broadcasted_iota(jnp.int32, x_ref.shape, 2)
    xb = jnp.where(j * hw_tile + lane < hw_total, x_ref[...], 0.0)
    acc_ref[...] += jnp.sum(xb, axis=-1)          # (1, C)

    @pl.when(j == pl.num_programs(1) - 1)
    def _():
        y = _se_mlp(acc_ref[...], p_ref)          # (1, C)
        y_ref[...] = y[:, :, None]                # (1, C, 1)


def _ca_rescale_kernel(x_ref, y_ref, o_ref):
    # (1, C, hw_tile) * (1, C, 1): channel gate broadcast over the lane axis.
    o_ref[...] = x_ref[...] * y_ref[...]


# ---------------------------------------------------------------------------
# Per-generation tuning.
# ---------------------------------------------------------------------------
def _tpu_config():
    """VMEM resident-bytes budget, vmem_limit and batch-axis semantics per TPU
    generation.  Conservative fallback keeps unknown hardware safe."""
    kind = ""
    try:
        kind = jax.devices()[0].device_kind.lower()
    except Exception:  # pragma: no cover - defensive
        pass
    if "v7" in kind:
        # 64 MiB physical VMEM per TC, 2 TensorCores each with their own DMA
        # path: force >= 2 grid steps and CORE_PARALLEL so both cores stream.
        return dict(budget=24 << 20, vmem_limit=48 << 20, min_grid_steps=2,
                    batch_sem=getattr(pltpu, "CORE_PARALLEL", pltpu.PARALLEL))
    if "v6" in kind:
        # 128 MiB physical VMEM (32 MiB scoped default): bigger blocks are free.
        return dict(budget=20 << 20, vmem_limit=64 << 20, min_grid_steps=1,
                    batch_sem=pltpu.PARALLEL)
    # v5e / v5p / unknown: multi-MiB blocks already amortize per-step overhead.
    return dict(budget=8 << 20, vmem_limit=32 << 20, min_grid_steps=1,
                batch_sem=pltpu.PARALLEL)


# ---------------------------------------------------------------------------
# Public wrapper.
# ---------------------------------------------------------------------------
def ca_layer(x_nchw, w1, b1, w2, b2, *, vmem_budget_override=None):
    """CALayer forward: x (N, C, H, W) f32 -> (N, C, H, W) f32."""
    N, C, H, W = x_nchw.shape
    assert C % 8 == 0, "channel must be a multiple of 8 (module uses channel // 8)"
    HW = H * W
    c8 = w1.shape[0]
    assert c8 == C // 8

    cfg = _tpu_config()
    budget = cfg["budget"] if vmem_budget_override is None else vmem_budget_override
    # 2 input + 2 output double-buffers resident per grid step.
    block_budget = max(1, budget // 4)

    x = x_nchw.reshape(N, C, HW)
    params = _pack_params(w1, b1, w2, b2, HW)
    R = params.shape[0]
    per_image = C * HW * 4

    if per_image <= block_budget:
        # ----------------- fused single-pass path --------------------------
        b_tile = max(1, min(N, block_budget // per_image))
        if cfg["min_grid_steps"] > 1 and N >= cfg["min_grid_steps"]:
            # v7x: guarantee >= 2 grid steps so both TensorCores get work.
            b_tile = min(b_tile, pl.cdiv(N, cfg["min_grid_steps"]))
        grid = (pl.cdiv(N, b_tile),)   # ragged last batch block is masked

        out = pl.pallas_call(
            _ca_fused_kernel,
            out_shape=jax.ShapeDtypeStruct((N, C, HW), jnp.float32),
            grid_spec=pltpu.PrefetchScalarGridSpec(
                num_scalar_prefetch=0,
                grid=grid,
                in_specs=[
                    pl.BlockSpec((b_tile, C, HW), lambda b: (b, 0, 0)),
                    # Constant index_map: DMA'd once, resident across steps.
                    pl.BlockSpec((R, C), lambda b: (0, 0)),
                ],
                out_specs=pl.BlockSpec((b_tile, C, HW), lambda b: (b, 0, 0)),
            ),
            compiler_params=pltpu.CompilerParams(
                dimension_semantics=(cfg["batch_sem"],),
                vmem_limit_bytes=cfg["vmem_limit"],
            ),
        )(x, params)
        return out.reshape(N, C, H, W)

    # ------------- two-pass HW-tiled fallback (large images) ---------------
    hw_tile = max(128, (block_budget // (C * 4)) // 128 * 128)
    if hw_tile >= HW:
        hw_tile = HW
    n_hw = pl.cdiv(HW, hw_tile)

    # Pass 1: pooled sums over HW blocks + SE MLP -> per-image channel gates.
    y = pl.pallas_call(
        functools.partial(_ca_pool_kernel, hw_total=HW),
        out_shape=jax.ShapeDtypeStruct((N, C, 1), jnp.float32),
        grid_spec=pltpu.PrefetchScalarGridSpec(
            num_scalar_prefetch=0,
            grid=(N, n_hw),
            in_specs=[
                pl.BlockSpec((1, C, hw_tile), lambda b, j: (b, 0, j)),
                pl.BlockSpec((R, C), lambda b, j: (0, 0)),
            ],
            out_specs=pl.BlockSpec((1, C, 1), lambda b, j: (b, 0, 0)),
            scratch_shapes=[pltpu.VMEM((1, C), jnp.float32)],
        ),
        compiler_params=pltpu.CompilerParams(
            dimension_semantics=(cfg["batch_sem"], pltpu.ARBITRARY),
            vmem_limit_bytes=cfg["vmem_limit"],
        ),
    )(x, params)

    # Pass 2: channel-wise rescale streamed over HW blocks.
    out = pl.pallas_call(
        _ca_rescale_kernel,
        out_shape=jax.ShapeDtypeStruct((N, C, HW), jnp.float32),
        grid_spec=pltpu.PrefetchScalarGridSpec(
            num_scalar_prefetch=0,
            grid=(N, n_hw),
            in_specs=[
                pl.BlockSpec((1, C, hw_tile), lambda b, j: (b, 0, j)),
                pl.BlockSpec((1, C, 1), lambda b, j: (b, 0, 0)),
            ],
            out_specs=pl.BlockSpec((1, C, hw_tile), lambda b, j: (b, 0, j)),
        ),
        compiler_params=pltpu.CompilerParams(
            dimension_semantics=(cfg["batch_sem"], pltpu.ARBITRARY),
            vmem_limit_bytes=cfg["vmem_limit"],
        ),
    )(x, y)
    return out.reshape(N, C, H, W)


# ---------------------------------------------------------------------------
# Test scaffolding.
# ---------------------------------------------------------------------------
def _init_params(key, channel):
    """Deterministic Conv2d-style init (kaiming-uniform-ish bounds)."""
    c8 = channel // 8
    k1, k2, k3, k4 = jax.random.split(key, 4)
    bound1 = 1.0 / (channel ** 0.5)
    bound2 = 1.0 / (c8 ** 0.5)
    w1 = jax.random.uniform(k1, (c8, channel), jnp.float32, -bound1, bound1)
    b1 = jax.random.uniform(k2, (c8,), jnp.float32, -bound1, bound1)
    w2 = jax.random.uniform(k3, (channel, c8), jnp.float32, -bound2, bound2)
    b2 = jax.random.uniform(k4, (channel,), jnp.float32, -bound2, bound2)
    return w1, b1, w2, b2


def _reference(x, w1, b1, w2, b2):
    # Pure-JAX reference of the PyTorch forward.
    pooled = jnp.mean(x, axis=(2, 3))                                  # (N, C)
    h = jnp.maximum(pooled @ w1.T + b1, 0.0)                           # (N, C//8)
    y = jax.nn.sigmoid(h @ w2.T + b2)                                  # (N, C)
    return x * y[:, :, None, None]


if __name__ == "__main__":
    key = jax.random.PRNGKey(0)
    kx, kp, kx2 = jax.random.split(key, 3)

    # --- main small config: fused single-block path -------------------------
    N, C, H, W = 2, 32, 16, 16          # channel must be divisible by 8
    x = jax.random.normal(kx, (N, C, H, W), jnp.float32)
    w1, b1, w2, b2 = _init_params(kp, C)

    out = jax.block_until_ready(ca_layer(x, w1, b1, w2, b2))
    ref = _reference(x, w1, b1, w2, b2)
    assert out.shape == (N, C, H, W)
    err = float(jnp.max(jnp.abs(out - ref)))
    assert err < 1e-5, f"fused path error {err}"

    # --- ragged cdiv batch tiling: N=3, b_tile=2 -> masked tail block -------
    per_image = C * H * W * 4
    N2 = 3
    x2 = jax.random.normal(kx2, (N2, C, H, W), jnp.float32)
    out2 = jax.block_until_ready(
        ca_layer(x2, w1, b1, w2, b2, vmem_budget_override=8 * per_image))
    err2 = float(jnp.max(jnp.abs(out2 - _reference(x2, w1, b1, w2, b2))))
    assert err2 < 1e-5, f"ragged-batch path error {err2}"

    # --- HW-tiled two-pass fallback: budget too small for one image ---------
    out3 = jax.block_until_ready(
        ca_layer(x, w1, b1, w2, b2, vmem_budget_override=2 * per_image))
    err3 = float(jnp.max(jnp.abs(out3 - ref)))
    assert err3 < 1e-5, f"two-pass path error {err3}"

    print("KERNEL_OK")
</pallas_src>

<mosaic_0001>
module attributes {stable_mosaic.version = 11 : i64} {
  func.func @_ca_fused_kernel(%arg0: i32, %arg1: memref<2x32x256xf32, #tpu.memory_space<vmem>>, %arg2: memref<49x32xf32, #tpu.memory_space<vmem>>, %arg3: memref<2x32x256xf32, #tpu.memory_space<vmem>>) attributes {dimension_semantics = [#tpu.dimension_semantics<parallel>], iteration_bounds = array<i64: 1>, scalar_prefetch = 0 : i64, scratch_operands = 0 : i64, tpu.core_type = #tpu.core_type<tc>, window_params = [{transform_indices = @transform_0, window_bounds = array<i64: 2, 32, 256>}, {pipeline_mode = #tpu.pipeline_mode<synchronous>, transform_indices = @transform_1, window_bounds = array<i64: 49, 32>}, {transform_indices = @transform_2, window_bounds = array<i64: 2, 32, 256>}]} {
    %c0 = arith.constant 0 : index
    %c0_0 = arith.constant 0 : index
    %c0_1 = arith.constant 0 : index
    %0 = vector.load %arg1[%c0, %c0_0, %c0_1] : memref<2x32x256xf32, #tpu.memory_space<vmem>>, vector<2x32x256xf32>
    %cst = arith.constant dense<0.000000e+00> : vector<2x32xf32>
    %1 = vector.multi_reduction <add>, %0, %cst [2] : vector<2x32x256xf32> to vector<2x32xf32>
    %c0_2 = arith.constant 0 : index
    %c0_3 = arith.constant 0 : index
    %2 = vector.load %arg2[%c0_2, %c0_3] : memref<49x32xf32, #tpu.memory_space<vmem>>, vector<32x4xf32>
    %c32 = arith.constant 32 : index
    %c0_4 = arith.constant 0 : index
    %3 = vector.load %arg2[%c32, %c0_4] : memref<49x32xf32, #tpu.memory_space<vmem>>, vector<4x32xf32>
    %c40 = arith.constant 40 : index
    %c0_5 = arith.constant 0 : index
    %4 = vector.load %arg2[%c40, %c0_5] : memref<49x32xf32, #tpu.memory_space<vmem>>, vector<1x4xf32>
    %c48 = arith.constant 48 : index
    %c0_6 = arith.constant 0 : index
    %5 = vector.load %arg2[%c48, %c0_6] : memref<49x32xf32, #tpu.memory_space<vmem>>, vector<1x32xf32>
    %cst_7 = arith.constant dense<0.000000e+00> : vector<2x4xf32>
    %6 = tpu.matmul %1, %2, %cst_7 {dimension_numbers = #tpu.dot_dimension_numbers<[1], [0], [0], [1], [0, 0, 1, 1], [], []>} : vector<2x32xf32>, vector<32x4xf32>, vector<2x4xf32> -> vector<2x4xf32>
    %7 = vector.broadcast %4 : vector<1x4xf32> to vector<2x4xf32>
    %8 = arith.addf %6, %7 : vector<2x4xf32>
    %cst_8 = arith.constant 0.000000e+00 : f32
    %9 = vector.broadcast %cst_8 : f32 to vector<2x4xf32>
    %10 = arith.maximumf %8, %9 : vector<2x4xf32>
    %cst_9 = arith.constant dense<0.000000e+00> : vector<2x32xf32>
    %11 = tpu.matmul %10, %3, %cst_9 {dimension_numbers = #tpu.dot_dimension_numbers<[1], [0], [0], [1], [0, 0, 1, 1], [], []>} : vector<2x4xf32>, vector<4x32xf32>, vector<2x32xf32> -> vector<2x32xf32>
    %12 = vector.broadcast %5 : vector<1x32xf32> to vector<2x32xf32>
    %13 = arith.addf %11, %12 : vector<2x32xf32>
    %14 = arith.negf %13 : vector<2x32xf32>
    %15 = math.exp %14 : vector<2x32xf32>
    %cst_10 = arith.constant 1.000000e+00 : f32
    %16 = vector.broadcast %cst_10 : f32 to vector<2x32xf32>
    %17 = arith.addf %16, %15 : vector<2x32xf32>
    %18 = arith.divf %16, %17 : vector<2x32xf32>
    %c0_11 = arith.constant 0 : index
    %c0_12 = arith.constant 0 : index
    %c0_13 = arith.constant 0 : index
    %19 = vector.load %arg1[%c0_11, %c0_12, %c0_13] : memref<2x32x256xf32, #tpu.memory_space<vmem>>, vector<2x32x256xf32>
    %20 = vector.shape_cast %18 : vector<2x32xf32> to vector<2x32x1xf32>
    %21 = vector.broadcast %20 : vector<2x32x1xf32> to vector<2x32x256xf32>
    %22 = arith.mulf %19, %21 : vector<2x32x256xf32>
    %c0_14 = arith.constant 0 : index
    %c0_15 = arith.constant 0 : index
    %c0_16 = arith.constant 0 : index
    %23 = vector.load %arg3[%c0_14, %c0_15, %c0_16] : memref<2x32x256xf32, #tpu.memory_space<vmem>>, vector<2x32x256xf32>
    tpu.vector_store %arg3[%c0_14, %c0_15, %c0_16], %22 {strides = array<i32>} : memref<2x32x256xf32, #tpu.memory_space<vmem>>, vector<2x32x256xf32>,
    return
  }
  func.func @transform_0(%arg0: i32) -> (i32, i32, i32) {
    %c0_i32 = arith.constant 0 : i32
    %c0_i32_0 = arith.constant 0 : i32
    %c0_i32_1 = arith.constant 0 : i32
    return %arg0, %c0_i32, %c0_i32_0 : i32, i32, i32
  }
  func.func @transform_1(%arg0: i32) -> (i32, i32) {
    %c0_i32 = arith.constant 0 : i32
    %c0_i32_0 = arith.constant 0 : i32
    %c0_i32_1 = arith.constant 0 : i32
    return %c0_i32, %c0_i32_0 : i32, i32
  }
  func.func @transform_2(%arg0: i32) -> (i32, i32, i32) {
    %c0_i32 = arith.constant 0 : i32
    %c0_i32_0 = arith.constant 0 : i32
    %c0_i32_1 = arith.constant 0 : i32
    return %arg0, %c0_i32, %c0_i32_0 : i32, i32, i32
  }
}

</mosaic_0001>

<llo_original>
// kernel: tpu_custom_call.1
$region0: #{tpu_custom_call.1}
  #allocation0 [shape = 'u32[]', space=smem, size = 0x4, offset = 0x4, fixed_abs, tag = 'smem constant byte address 0x4 - core index']
  #allocation1 [shape = 'u32[144,128]{1,0:T(1,128)}', space=vmem, size = 0x12000, scoped, tag = 'internal scratch']
  %s0 = inlined_call_operand.hbm [shape: f32[2,32,256], index: 0, kind: input, shape index: {}]
  %s1 = inlined_call_operand.vmem [shape: f32[49,32], index: 1, kind: input, shape index: {}]
  %s2 = inlined_call_operand.hbm [shape: f32[2,32,256], index: 2, kind: output, shape index: {}]
  %s3 = sld [smem:[#allocation0]]
  $region22: #{tpu_custom_call.1} parent=0
    _
  %s5 = ssub.s32 1, %s3
  %s6 = scalar_select 0, %s5, %s3
  $region1: #{tpu_custom_call.1} parent=0
    #allocation2 [shape = 'u8[65536]{0}', space=vmem, size = 0x10000, scoped, tag = 'input window, operand 0, single buffered']
    #allocation3 [shape = 's32[1]{0}', space=sflag, size = 0x4, scoped, tag = 'scoped memory for tpu_custom_call.1']
    #allocation4 [shape = 's32[1]{0}', space=sflag, size = 0x4, scoped, tag = 'scoped memory for tpu_custom_call.1']
    #allocation5 [shape = 'u8[65536]{0}', space=vmem, size = 0x10000, scoped, tag = 'output window, operand 0, single buffered']
    %7 = vsyncpa [#allocation3], 0
    %8 = vsyncpa [#allocation4], 0
    // Predicated region
    $region2: #{tpu_custom_call.1} parent=1 // pred_check
      _
    $region3: #{tpu_custom_call.1} parent=1 // pred_check_branch
      %10 = sbr.rel (0) target = $region5
    $region4: #{tpu_custom_call.1} parent=1 // pred_region
      %s12 = ssub.s32 2048, 2048
      %13 = vsyncadd [#allocation3], %s12
      %s14 = sshll.u32 [#allocation2], 4
      %s15 = int_to_ptr.vmem [resolvable:$true] %s14
      %20 = dma.hbm_to_vmem [thread:$0]  %s0, 2048, %s15, [#allocation3], 256, 256, 16
    $region5: #{tpu_custom_call.1} parent=1 // pred_fallthru
      _
    // Predicated region
    $region6: #{tpu_custom_call.1} parent=1 // pred_check
      _
    $region7: #{tpu_custom_call.1} parent=1 // pred_check_branch
      %22 = sbr.rel (0) target = $region9
    $region8: #{tpu_custom_call.1} parent=1 // pred_region
      _
    $region9: #{tpu_custom_call.1} parent=1 // pred_fallthru
      _
    // Predicated region
    $region10: #{tpu_custom_call.1} parent=1 // pred_check
      _
    $region11: #{tpu_custom_call.1} parent=1 // pred_check_branch
      %24 = sbr.rel (0) target = $region13
    $region12: #{tpu_custom_call.1} parent=1 // pred_region
      %25 = dma.done [#allocation3], 2048
    $region13: #{tpu_custom_call.1} parent=1 // pred_fallthru
      _
    %v26 = vld [vmem:[#allocation2] sm:$0xff]
    %v27 = vld [vmem:[#allocation2 + $0x8] sm:$0xff]
    %v28 = vld [vmem:[#allocation2 + $0x10] sm:$0xff]
    %v29 = vld [vmem:[#allocation2 + $0x18] sm:$0xff]
    %v30 = vld [vmem:[#allocation2 + $0x20] sm:$0xff]
    %v31 = vld [vmem:[#allocation2 + $0x28] sm:$0xff]
    %v32 = vld [vmem:[#allocation2 + $0x30] sm:$0xff]
    %v33 = vld [vmem:[#allocation2 + $0x38] sm:$0xff]
    %v34 = vld [vmem:[#allocation2 + $0x40] sm:$0xff]
    %v35 = vld [vmem:[#allocation2 + $0x48] sm:$0xff]
    %v36 = vld [vmem:[#allocation2 + $0x50] sm:$0xff]
    %v37 = vld [vmem:[#allocation2 + $0x58] sm:$0xff]
    %v38 = vld [vmem:[#allocation2 + $0x60] sm:$0xff]
    %v39 = vld [vmem:[#allocation2 + $0x68] sm:$0xff]
    %v40 = vld [vmem:[#allocation2 + $0x70] sm:$0xff]
    %v41 = vld [vmem:[#allocation2 + $0x78] sm:$0xff]
    %v42 = vadd.f32 %v26, %v27
    %43 = vadd.xlane.f32.xlu0 %v42
    %v44 = vpop.xlane.xlu0 %43
    %v45 = vadd.f32 %v28, %v29
    %46 = vadd.xlane.f32.xlu0 %v45
    %v47 = vpop.xlane.xlu0 %46
    %v48 = vadd.f32 %v30, %v31
    %49 = vadd.xlane.f32.xlu0 %v48
    %v50 = vpop.xlane.xlu0 %49
    %v51 = vadd.f32 %v32, %v33
    %52 = vadd.xlane.f32.xlu0 %v51
    %v53 = vpop.xlane.xlu0 %52
    %v54 = vadd.f32 %v34, %v35
    %55 = vadd.xlane.f32.xlu0 %v54
    %v56 = vpop.xlane.xlu0 %55
    %v57 = vadd.f32 %v36, %v37
    %58 = vadd.xlane.f32.xlu0 %v57
    %v59 = vpop.xlane.xlu0 %58
    %v60 = vadd.f32 %v38, %v39
    %61 = vadd.xlane.f32.xlu0 %v60
    %v62 = vpop.xlane.xlu0 %61
    %v63 = vadd.f32 %v40, %v41
    %64 = vadd.xlane.f32.xlu0 %v63
    %v65 = vpop.xlane.xlu0 %64
    %v66 = vld [vmem:[%s1] sm:$0xff]
    %v67 = vld [vmem:[%s1 + $0x8] sm:$0xff]
    %v68 = vld [vmem:[%s1 + $0x10] sm:$0xff]
    %v69 = vld [vmem:[%s1 + $0x18] sm:$0xff]
    %v70 = vld [vmem:[%s1 + $0x20] sm:$0xf]
    %v71 = vld [vmem:[%s1 + $0x28] sm:$0x1]
    %v72 = vld [vmem:[%s1 + $0x30] sm:$0x1]
    %v73 = vlaneseq
    %v74 = vshrl.u32 %v73, 7
    %v75 = vsub.s32 0, %v74
    %v76 = vrot.slane %v71, %v75
    %v85 = vlaneseq
    %v86 = vand.u32 %v85, 127
    %v87 = vlaneseq
    %v88 = vshrl.u32 %v87, 7
    %v89 = vsub.s32 %v86, %v88
    %v90 = vrot.slane %v44, %v89
    %v91 = vadd.s32 %v86, 4294967288
    %v92 = vlaneseq
    %v93 = vshrl.u32 %v92, 7
    %v94 = vsub.s32 %v91, %v93
    %v95 = vrot.slane %v47, %v94
    %vm96 = vcmask 130112
    %v97 = vsel %vm96, %v95, %v90
    %v98 = vadd.s32 %v86, 4294967280
    %v99 = vlaneseq
    %v100 = vshrl.u32 %v99, 7
    %v101 = vsub.s32 %v98, %v100
    %v102 = vrot.slane %v50, %v101
    %vm103 = vcmask 195712
    %v104 = vsel %vm103, %v102, %v97
    %v105 = vadd.s32 %v86, 4294967272
    %v106 = vlaneseq
    %v107 = vshrl.u32 %v106, 7
    %v108 = vsub.s32 %v105, %v107
    %v109 = vrot.slane %v53, %v108
    %vm110 = vcmask 261312
    %v111 = vsel %vm110, %v109, %v104
    %v112 = vlaneseq
    %v113 = vshrl.u32 %v112, 7
    %v114 = vsub.s32 %v86, %v113
    %v115 = vrot.slane %v56, %v114
    %v116 = vlaneseq
    %v117 = vshrl.u32 %v116, 7
    %v118 = vsub.s32 %v91, %v117
    %v119 = vrot.slane %v59, %v118
    %v120 = vsel %vm96, %v119, %v115
    %v121 = vlaneseq
    %v122 = vshrl.u32 %v121, 7
    %v123 = vsub.s32 %v98, %v122
    %v124 = vrot.slane %v62, %v123
    %v125 = vsel %vm103, %v124, %v120
    %v126 = vlaneseq
    %v127 = vshrl.u32 %v126, 7
    %v128 = vsub.s32 %v105, %v127
    %v129 = vrot.slane %v65, %v128
    %v130 = vsel %vm110, %v129, %v125
    %vm131 = vcmask 1041409
    %v132 = vsel %vm131, %v130, %v111
    %vm133 = vcmask 261120
    %v134 = vsel %vm133, %v132, 0
    %136 = vmatprep.subr.mxu0 0.0
    %137 = vmatpush1.msra.mxu0 %v66
    %138 = vmatprep.subr.mxu0 0.0
    %139 = vmatpush1.msra.mxu0 %v67
    %140 = vmatprep.subr.mxu0 0.0
    %141 = vmatpush1.msra.mxu0 %v68
    %142 = vmatprep.subr.mxu0 0.0
    %143 = vmatpush1.msra.mxu0 %v69
    %144 = vmatprep.subr.mxu0 0.0
    %145 = vmatpush1.msra.mxu0 0.0
    %146 = vmatprep.subr.mxu0 0.0
    %147 = vmatpush1.msra.mxu0 0.0
    %148 = vmatprep.subr.mxu0 0.0
    %149 = vmatpush1.msra.mxu0 0.0
    %150 = vmatprep.subr.mxu0 0.0
    %151 = vmatpush1.msra.mxu0 0.0
    %152 = vmatprep.subr.mxu0 0.0
    %153 = vmatpush1.msra.mxu0 0.0
    %154 = vmatprep.subr.mxu0 0.0
    %155 = vmatpush1.msra.mxu0 0.0
    %156 = vmatprep.subr.mxu0 0.0
    %157 = vmatpush1.msra.mxu0 0.0
    %158 = vmatprep.subr.mxu0 0.0
    %159 = vmatpush1.msra.mxu0 0.0
    %160 = vmatprep.subr.mxu0 0.0
    %161 = vmatpush1.msra.mxu0 0.0
    %162 = vmatprep.subr.mxu0 0.0
    %163 = vmatpush1.msra.mxu0 0.0
    %164 = vmatprep.subr.mxu0 0.0
    %165 = vmatpush1.msra.mxu0 0.0
    %166 = vmatprep.subr.mxu0 0.0
    %167 = vmatpush1.msra.mxu0 0.0
    %168 = vmatprep.subr.mxu0 0.0
    %169 = vmatpush1.msra.mxu0 0.0
    %170 = vmatprep.subr.mxu0 0.0
    %171 = vmatpush1.msra.mxu0 0.0
    %172 = vmatprep.subr.mxu0 0.0
    %173 = vmatpush1.msra.mxu0 0.0
    %174 = vmatprep.subr.mxu0 0.0
    %175 = vmatpush1.msra.mxu0 0.0
    %176 = vmatprep.subr.mxu0 0.0
    %177 = vmatpush1.msra.mxu0 0.0
    %178 = vmatprep.subr.mxu0 0.0
    %179 = vmatpush1.msra.mxu0 0.0
    %180 = vmatprep.subr.mxu0 0.0
    %181 = vmatpush1.msra.mxu0 0.0
    %182 = vmatprep.subr.mxu0 0.0
    %183 = vmatpush1.msra.mxu0 0.0
    %184 = vmatprep.subr.mxu0 0.0
    %185 = vmatpush1.msra.mxu0 0.0
    %186 = vmatprep.subr.mxu0 0.0
    %187 = vmatpush1.msra.mxu0 0.0
    %188 = vmatprep.subr.mxu0 0.0
    %189 = vmatpush1.msra.mxu0 0.0
    %190 = vmatprep.subr.mxu0 0.0
    %191 = vmatpush1.msra.mxu0 0.0
    %192 = vmatprep.subr.mxu0 0.0
    %193 = vmatpush1.msra.mxu0 0.0
    %194 = vmatprep.subr.mxu0 0.0
    %195 = vmatpush1.msra.mxu0 0.0
    %196 = vmatprep.subr.mxu0 0.0
    %197 = vmatpush1.msra.mxu0 0.0
    %198 = vmatprep.subr.mxu0 0.0
    %199 = vmatpush1.msra.mxu0 0.0
    %200 = vmatprep.mubr.f32.mxu0 0.0
    %201 = vmatmul.mubr.f32.gmra.mrb[0].mxu0 %v134
    %v202 = vpop.f32.mrb[0].mxu0
    %v203 = vadd.f32 %v76, %v202
    %v204 = vpop.f32.mrb[0].mxu0
    %205 = vdwg.mxu0
    %v206 = vmax.f32 %v203, 0.0
    %v207 = vlaneseq
    %v208 = vshrl.u32 %v207, 7
    %v209 = vsub.s32 0, %v208
    %v210 = vrot.slane %v72, %v209
    %vm211 = vcmask 31744
    %v213 = vsel %vm211, %v206, 0
    %vm215 = vcmask 1043456
    %v217 = vsel %vm215, %v70, 0
    %219 = vmatprep.subr.mxu0 0.0
    %220 = vmatpush1.msra.mxu0 %v217
    %221 = vmatprep.subr.mxu0 0.0
    %222 = vmatpush1.msra.mxu0 0.0
    %223 = vmatprep.subr.mxu0 0.0
    %224 = vmatpush1.msra.mxu0 0.0
    %225 = vmatprep.subr.mxu0 0.0
    %226 = vmatpush1.msra.mxu0 0.0
    %227 = vmatprep.subr.mxu0 0.0
    %228 = vmatpush1.msra.mxu0 0.0
    %229 = vmatprep.subr.mxu0 0.0
    %230 = vmatpush1.msra.mxu0 0.0
    %231 = vmatprep.subr.mxu0 0.0
    %232 = vmatpush1.msra.mxu0 0.0
    %233 = vmatprep.subr.mxu0 0.0
    %234 = vmatpush1.msra.mxu0 0.0
    %235 = vmatprep.subr.mxu0 0.0
    %236 = vmatpush1.msra.mxu0 0.0
    %237 = vmatprep.subr.mxu0 0.0
    %238 = vmatpush1.msra.mxu0 0.0
    %239 = vmatprep.subr.mxu0 0.0
    %240 = vmatpush1.msra.mxu0 0.0
    %241 = vmatprep.subr.mxu0 0.0
    %242 = vmatpush1.msra.mxu0 0.0
    %243 = vmatprep.subr.mxu0 0.0
    %244 = vmatpush1.msra.mxu0 0.0
    %245 = vmatprep.subr.mxu0 0.0
    %246 = vmatpush1.msra.mxu0 0.0
    %247 = vmatprep.subr.mxu0 0.0
    %248 = vmatpush1.msra.mxu0 0.0
    %249 = vmatprep.subr.mxu0 0.0
    %250 = vmatpush1.msra.mxu0 0.0
    %251 = vmatprep.subr.mxu0 0.0
    %252 = vmatpush1.msra.mxu0 0.0
    %253 = vmatprep.subr.mxu0 0.0
    %254 = vmatpush1.msra.mxu0 0.0
    %255 = vmatprep.subr.mxu0 0.0
    %256 = vmatpush1.msra.mxu0 0.0
    %257 = vmatprep.subr.mxu0 0.0
    %258 = vmatpush1.msra.mxu0 0.0
    %259 = vmatprep.subr.mxu0 0.0
    %260 = vmatpush1.msra.mxu0 0.0
    %261 = vmatprep.subr.mxu0 0.0
    %262 = vmatpush1.msra.mxu0 0.0
    %263 = vmatprep.subr.mxu0 0.0
    %264 = vmatpush1.msra.mxu0 0.0
    %265 = vmatprep.subr.mxu0 0.0
    %266 = vmatpush1.msra.mxu0 0.0
    %267 = vmatprep.subr.mxu0 0.0
    %268 = vmatpush1.msra.mxu0 0.0
    %269 = vmatprep.subr.mxu0 0.0
    %270 = vmatpush1.msra.mxu0 0.0
    %271 = vmatprep.subr.mxu0 0.0
    %272 = vmatpush1.msra.mxu0 0.0
    %273 = vmatprep.subr.mxu0 0.0
    %274 = vmatpush1.msra.mxu0 0.0
    %275 = vmatprep.subr.mxu0 0.0
    %276 = vmatpush1.msra.mxu0 0.0
    %277 = vmatprep.subr.mxu0 0.0
    %278 = vmatpush1.msra.mxu0 0.0
    %279 = vmatprep.subr.mxu0 0.0
    %280 = vmatpush1.msra.mxu0 0.0
    %281 = vmatprep.subr.mxu0 0.0
    %282 = vmatpush1.msra.mxu0 0.0
    %283 = vmatprep.mubr.f32.mxu0 0.0
    %284 = vmatmul.mubr.f32.gmra.mrb[0].mxu0 %v213
    %v285 = vpop.f32.mrb[0].mxu0
    %v286 = vadd.f32 %v210, %v285
    %v287 = vpop.f32.mrb[0].mxu0
    %288 = vdwg.mxu0
    %v289 = vxor.u32 %v286, 2147483648
    %v290 = vmul.f32 %v289, 1.442695
    %v291 = vpow.pop %v290
    %v292 = vadd.f32 %v291, 1.0
    %v293 = vrcp.pop %v292
    %v294 = vmul.f32 1.0, %v293
    %v295 = vlaneseq
    %v296 = vshrl.u32 %v295, 7
    %v297 = vsub.s32 0, %v296
    %v298 = vrot.slane %v294, %v297
    %300 = vbcast.lane.b32.xlu0 %v298, 256
    %v301 = vpop.permute.xlu0 %300
    %s303 = sor.u32 256, 8
    %304 = vbcast.lane.b32.xlu0 %v298, %s303
    %v305 = vpop.permute.xlu0 %304
    %s307 = sor.u32 256, 16
    %308 = vbcast.lane.b32.xlu0 %v298, %s307
    %v309 = vpop.permute.xlu0 %308
    %s311 = sor.u32 256, 24
    %312 = vbcast.lane.b32.xlu0 %v298, %s311
    %v313 = vpop.permute.xlu0 %312
    %v314 = vlaneseq
    %v315 = vshrl.u32 %v314, 7
    %v316 = vsub.s32 1, %v315
    %v317 = vrot.slane %v294, %v316
    %319 = vbcast.lane.b32.xlu0 %v317, 256
    %v320 = vpop.permute.xlu0 %319
    %s322 = sor.u32 256, 8
    %323 = vbcast.lane.b32.xlu0 %v317, %s322
    %v324 = vpop.permute.xlu0 %323
    %s326 = sor.u32 256, 16
    %327 = vbcast.lane.b32.xlu0 %v317, %s326
    %v328 = vpop.permute.xlu0 %327
    %s330 = sor.u32 256, 24
    %331 = vbcast.lane.b32.xlu0 %v317, %s330
    %v332 = vpop.permute.xlu0 %331
    %v333 = vmul.f32 %v26, %v301
    %v334 = vmul.f32 %v27, %v301
    %v335 = vmul.f32 %v28, %v305
    %v336 = vmul.f32 %v29, %v305
    %v337 = vmul.f32 %v30, %v309
    %v338 = vmul.f32 %v31, %v309
    %v339 = vmul.f32 %v32, %v313
    %v340 = vmul.f32 %v33, %v313
    %v341 = vmul.f32 %v34, %v320
    %v342 = vmul.f32 %v35, %v320
    %v343 = vmul.f32 %v36, %v324
    %v344 = vmul.f32 %v37, %v324
    %v345 = vmul.f32 %v38, %v328
    %v346 = vmul.f32 %v39, %v328
    %v347 = vmul.f32 %v40, %v332
    %v348 = vmul.f32 %v41, %v332
    %349 = vst [vmem:[#allocation5] sm:$0xff] %v333
    %350 = vst [vmem:[#allocation5 + $0x8] sm:$0xff] %v334
    %351 = vst [vmem:[#allocation5 + $0x10] sm:$0xff] %v335
    %352 = vst [vmem:[#allocation5 + $0x18] sm:$0xff] %v336
    %353 = vst [vmem:[#allocation5 + $0x20] sm:$0xff] %v337
    %354 = vst [vmem:[#allocation5 + $0x28] sm:$0xff] %v338
    %355 = vst [vmem:[#allocation5 + $0x30] sm:$0xff] %v339
    %356 = vst [vmem:[#allocation5 + $0x38] sm:$0xff] %v340
    %357 = vst [vmem:[#allocation5 + $0x40] sm:$0xff] %v341
    %358 = vst [vmem:[#allocation5 + $0x48] sm:$0xff] %v342
    %359 = vst [vmem:[#allocation5 + $0x50] sm:$0xff] %v343
    %360 = vst [vmem:[#allocation5 + $0x58] sm:$0xff] %v344
    %361 = vst [vmem:[#allocation5 + $0x60] sm:$0xff] %v345
    %362 = vst [vmem:[#allocation5 + $0x68] sm:$0xff] %v346
    %363 = vst [vmem:[#allocation5 + $0x70] sm:$0xff] %v347
    %364 = vst [vmem:[#allocation5 + $0x78] sm:$0xff] %v348
    // Predicated region
    $region14: #{tpu_custom_call.1} parent=1 // pred_check
      _
    $region15: #{tpu_custom_call.1} parent=1 // pred_check_branch
      %366 = sbr.rel (0) target = $region17
    $region16: #{tpu_custom_call.1} parent=1 // pred_region
      %s368 = ssub.s32 2048, 2048
      %369 = vsyncadd [#allocation4], %s368
      %s370 = sshll.u32 [#allocation5], 4
      %s371 = int_to_ptr.vmem [resolvable:$true] %s370
      %376 = dma.vmem_to_hbm [thread:$0]  %s371, 2048, %s2, [#allocation4], 256, 256, 16
    $region17: #{tpu_custom_call.1} parent=1 // pred_fallthru
      _
    // Predicated region
    $region18: #{tpu_custom_call.1} parent=1 // pred_check
      _
    $region19: #{tpu_custom_call.1} parent=1 // pred_check_branch
      %378 = sbr.rel (0) target = $region21
    $region20: #{tpu_custom_call.1} parent=1 // pred_region
      %379 = dma.done [#allocation4], 2048
    $region21: #{tpu_custom_call.1} parent=1 // pred_fallthru
      _
    %380 = vsyncpa [#allocation3], 1
    %381 = vsyncpa [#allocation4], 1

</llo_original>
